<compile_context>
chip_gen: v6e
topology: v6e:2x2x1
jax: 0.10.0
libtpu: 0.0.40
codegen_flags: <defaults>
</compile_context>

<pallas_src>
import jax
import jax.numpy as jnp
import numpy as np
from jax.experimental import pallas as pl
from jax.experimental.pallas import tpu as pltpu


def _round_up(x, m):
    return ((x + m - 1) // m) * m


def _flinear_matmul_kernel(x_ref, w_ref, b_ref, y_ref):
    """Y = X @ W + b on one (tm, 2*Kp) tile of X; weights/bias resident."""
    y_ref[...] = (
        jnp.dot(x_ref[...], w_ref[...], preferred_element_type=jnp.float32)
        + b_ref[...]
    )


def flinear_spectral_matmul(xc, w_big, b_big, *, tm):
    """xc: (Npad, 2*Kp) f32, w_big: (2*Kp, 2*Op) f32, b_big: (1, 2*Op) f32.

    Returns (Npad, 2*Op) f32 = [Yr | Yi] (padded)."""
    n_pad, k2 = xc.shape
    o2 = w_big.shape[1]
    assert n_pad % tm == 0
    grid = (n_pad // tm,)
    return pl.pallas_call(
        _flinear_matmul_kernel,
        out_shape=jax.ShapeDtypeStruct((n_pad, o2), jnp.float32),
        grid=grid,
        in_specs=[
            pl.BlockSpec((tm, k2), lambda i: (i, 0)),   # streamed X tile
            pl.BlockSpec((k2, o2), lambda i: (0, 0)),   # resident fused weights
            pl.BlockSpec((1, o2), lambda i: (0, 0)),    # resident bias row
        ],
        out_specs=pl.BlockSpec((tm, o2), lambda i: (i, 0)),
        compiler_params=pltpu.CompilerParams(
            dimension_semantics=("parallel",),          # N-tiles independent
        ),
    )(xc, w_big, b_big)


def _pick_tile_rows(n, k2, o2):
    """Largest row-tile that keeps double-buffered X/Y tiles + weights in VMEM."""
    if n <= 512:
        return _round_up(max(n, 8), 8)
    budget = 24 * 1024 * 1024                       # stay under scoped-VMEM default
    weights_bytes = (k2 * o2 + o2) * 4              # resident, single-buffered
    per_row_bytes = 2 * (k2 + o2) * 4               # double-buffered X + Y rows
    tm = (budget - weights_bytes) // max(per_row_bytes, 1)
    tm = max(8, min(1024, (tm // 8) * 8))
    return tm


class FLinearPallas:
    """JAX/Pallas port of the PyTorch FLinear module."""

    def __init__(self, inp, out, key):
        self.inp = inp
        self.out = out
        self.inp_size = inp // 2 + 1       # K complex coeffs in
        self.out_size = out // 2 + 1       # O complex coeffs out
        # torch.fft.irfft default length: n = 2 * (out_size - 1) (== out for even out).
        self.out_len = 2 * (self.out_size - 1)

        k1, k2, k3, k4 = jax.random.split(key, 4)
        bound = 1.0 / np.sqrt(self.inp_size)
        # Complex weight (out_size, inp_size) and bias (out_size,), stored as
        # real/imag float32 planes.  Deterministic synthetic init.
        self.w_real = jax.random.uniform(k1, (self.out_size, self.inp_size),
                                         jnp.float32, -bound, bound)
        self.w_imag = jax.random.uniform(k2, (self.out_size, self.inp_size),
                                         jnp.float32, -bound, bound)
        self.b_real = jax.random.uniform(k3, (self.out_size,),
                                         jnp.float32, -bound, bound)
        self.b_imag = jax.random.uniform(k4, (self.out_size,),
                                         jnp.float32, -bound, bound)

        # --- Pre-padded, pre-transposed, fused weights (paid once). ---
        K, O = self.inp_size, self.out_size
        self.k_pad = _round_up(K, 128)     # lane-dense contraction halves
        self.o_pad = _round_up(O, 128)     # lane-dense output halves

        wr = jnp.zeros((self.k_pad, self.o_pad), jnp.float32)
        wr = wr.at[:K, :O].set(self.w_real.T)
        wi = jnp.zeros((self.k_pad, self.o_pad), jnp.float32)
        wi = wi.at[:K, :O].set(self.w_imag.T)
        # [Xr|Xi] @ [[Wr, Wi], [-Wi, Wr]] = [Xr@Wr - Xi@Wi | Xr@Wi + Xi@Wr]
        self.w_big = jnp.concatenate(
            [jnp.concatenate([wr, wi], axis=1),
             jnp.concatenate([-wi, wr], axis=1)],
            axis=0)                                            # (2*Kp, 2*Op)

        b_big = jnp.zeros((1, 2 * self.o_pad), jnp.float32)
        b_big = b_big.at[0, :O].set(self.b_real)
        b_big = b_big.at[0, self.o_pad:self.o_pad + O].set(self.b_imag)
        self.b_big = b_big

    def __call__(self, x):
        # x: (..., inp) real float32
        orig_shape = x.shape
        K, O = self.inp_size, self.out_size

        # TODO(synk): no Pallas FFT primitive; rfft/irfft via jnp.fft.
        xf = jnp.fft.rfft(x.astype(jnp.float32), axis=-1)      # (..., K) complex64
        xf2 = xf.reshape(-1, K)                                # (N, K)
        n = xf2.shape[0]

        k2 = 2 * self.k_pad
        o2 = 2 * self.o_pad
        tm = _pick_tile_rows(n, k2, o2)
        n_pad = _round_up(n, tm)

        # Stacked [Xr | Xi] input slab, zero-padded to (8,128)-aligned shape.
        xr = jnp.pad(jnp.real(xf2).astype(jnp.float32),
                     ((0, n_pad - n), (0, self.k_pad - K)))
        xi = jnp.pad(jnp.imag(xf2).astype(jnp.float32),
                     ((0, n_pad - n), (0, self.k_pad - K)))
        xc = jnp.concatenate([xr, xi], axis=1)                 # (Npad, 2*Kp)

        y_big = flinear_spectral_matmul(xc, self.w_big, self.b_big, tm=tm)

        yr = y_big[:n, :O]
        yi = y_big[:n, self.o_pad:self.o_pad + O]
        yf = jax.lax.complex(yr, yi)                           # (N, O) complex64
        yf = yf.reshape(orig_shape[:-1] + (O,))
        # Match torch.fft.irfft default: n = 2 * (out_size - 1).
        y = jnp.fft.irfft(yf, n=self.out_len, axis=-1)
        return y.astype(jnp.float32)


def _reference(module, x):
    """Pure-JAX reference (complex matmul via jnp)."""
    xf = jnp.fft.rfft(x.astype(jnp.float32), axis=-1)
    w = (module.w_real + 1j * module.w_imag).astype(jnp.complex64)
    b = (module.b_real + 1j * module.b_imag).astype(jnp.complex64)
    yf = jnp.einsum('...k,ok->...o', xf, w) + b
    return jnp.fft.irfft(yf, n=module.out_len, axis=-1).astype(jnp.float32)


if __name__ == "__main__":
    key = jax.random.PRNGKey(0)
    k_param, k_x = jax.random.split(key)

    B, S, INP, OUT = 2, 8, 16, 16
    module = FLinearPallas(INP, OUT, k_param)
    x = jax.random.normal(k_x, (B, S, INP), dtype=jnp.float32)

    y = jax.block_until_ready(module(x))
    y_ref = jax.block_until_ready(_reference(module, x))

    assert y.shape == (B, S, module.out_len), y.shape
    assert np.allclose(np.asarray(y), np.asarray(y_ref), atol=1e-4, rtol=1e-4)

    print("KERNEL_OK")
</pallas_src>

<mosaic_0001>
module attributes {stable_mosaic.version = 11 : i64} {
  func.func @_flinear_matmul_kernel(%arg0: i32, %arg1: memref<16x256xf32, #tpu.memory_space<vmem>>, %arg2: memref<256x256xf32, #tpu.memory_space<vmem>>, %arg3: memref<1x256xf32, #tpu.memory_space<vmem>>, %arg4: memref<16x256xf32, #tpu.memory_space<vmem>>) attributes {dimension_semantics = [#tpu.dimension_semantics<parallel>], iteration_bounds = array<i64: 1>, scalar_prefetch = 0 : i64, scratch_operands = 0 : i64, tpu.core_type = #tpu.core_type<tc>, window_params = [{transform_indices = @transform_0, window_bounds = array<i64: 16, 256>}, {pipeline_mode = #tpu.pipeline_mode<synchronous>, transform_indices = @transform_1, window_bounds = array<i64: 256, 256>}, {pipeline_mode = #tpu.pipeline_mode<synchronous>, transform_indices = @transform_2, window_bounds = array<i64: 1, 256>}, {transform_indices = @transform_3, window_bounds = array<i64: 16, 256>}]} {
    %c0 = arith.constant 0 : index
    %c0_0 = arith.constant 0 : index
    %0 = vector.load %arg1[%c0, %c0_0] : memref<16x256xf32, #tpu.memory_space<vmem>>, vector<16x256xf32>
    %c0_1 = arith.constant 0 : index
    %c0_2 = arith.constant 0 : index
    %1 = vector.load %arg2[%c0_1, %c0_2] : memref<256x256xf32, #tpu.memory_space<vmem>>, vector<256x256xf32>
    %cst = arith.constant dense<0.000000e+00> : vector<16x256xf32>
    %2 = tpu.matmul %0, %1, %cst {dimension_numbers = #tpu.dot_dimension_numbers<[1], [0], [0], [1], [0, 0, 1, 1], [], []>} : vector<16x256xf32>, vector<256x256xf32>, vector<16x256xf32> -> vector<16x256xf32>
    %c0_3 = arith.constant 0 : index
    %c0_4 = arith.constant 0 : index
    %3 = vector.load %arg3[%c0_3, %c0_4] : memref<1x256xf32, #tpu.memory_space<vmem>>, vector<1x256xf32>
    %4 = vector.broadcast %3 : vector<1x256xf32> to vector<16x256xf32>
    %5 = arith.addf %2, %4 : vector<16x256xf32>
    %c0_5 = arith.constant 0 : index
    %c0_6 = arith.constant 0 : index
    %6 = vector.load %arg4[%c0_5, %c0_6] : memref<16x256xf32, #tpu.memory_space<vmem>>, vector<16x256xf32>
    tpu.vector_store %arg4[%c0_5, %c0_6], %5 {strides = array<i32>} : memref<16x256xf32, #tpu.memory_space<vmem>>, vector<16x256xf32>,
    return
  }
  func.func @transform_0(%arg0: i32) -> (i32, i32) {
    %c0_i32 = arith.constant 0 : i32
    %c0_i32_0 = arith.constant 0 : i32
    return %arg0, %c0_i32 : i32, i32
  }
  func.func @transform_1(%arg0: i32) -> (i32, i32) {
    %c0_i32 = arith.constant 0 : i32
    %c0_i32_0 = arith.constant 0 : i32
    %c0_i32_1 = arith.constant 0 : i32
    return %c0_i32, %c0_i32_0 : i32, i32
  }
  func.func @transform_2(%arg0: i32) -> (i32, i32) {
    %c0_i32 = arith.constant 0 : i32
    %c0_i32_0 = arith.constant 0 : i32
    %c0_i32_1 = arith.constant 0 : i32
    return %c0_i32, %c0_i32_0 : i32, i32
  }
  func.func @transform_3(%arg0: i32) -> (i32, i32) {
    %c0_i32 = arith.constant 0 : i32
    %c0_i32_0 = arith.constant 0 : i32
    return %arg0, %c0_i32 : i32, i32
  }
}

</mosaic_0001>

<llo_original>
// kernel: tpu_custom_call.1
$region0: #{tpu_custom_call.1}
  #allocation0 [shape = 'u32[]', space=smem, size = 0x4, offset = 0x4, fixed_abs, tag = 'smem constant byte address 0x4 - core index']
  #allocation1 [shape = 'u32[144,128]{1,0:T(1,128)}', space=vmem, size = 0x12000, scoped, tag = 'internal scratch']
  %s0 = inlined_call_operand.hbm [shape: f32[16,256], index: 0, kind: input, shape index: {}]
  %s1 = inlined_call_operand.hbm [shape: f32[256,256], index: 1, kind: input, shape index: {}]
  %s2 = inlined_call_operand.vmem [shape: f32[1,256], index: 2, kind: input, shape index: {}]
  %s3 = inlined_call_operand.hbm [shape: f32[16,256], index: 3, kind: output, shape index: {}]
  %s4 = sld [smem:[#allocation0]]
  $region30: #{tpu_custom_call.1} parent=0
    _
  %s6 = ssub.s32 1, %s4
  %s7 = scalar_select 0, %s6, %s4
  $region1: #{tpu_custom_call.1} parent=0
    #allocation2 [shape = 'u8[16384]{0}', space=vmem, size = 0x4000, scoped, tag = 'input window, operand 0, single buffered']
    #allocation3 [shape = 's32[1]{0}', space=sflag, size = 0x4, scoped, tag = 'scoped memory for tpu_custom_call.1']
    #allocation4 [shape = 's32[1]{0}', space=sflag, size = 0x4, scoped, tag = 'scoped memory for tpu_custom_call.1']
    #allocation5 [shape = 'u8[262144]{0}', space=vmem, size = 0x40000, scoped, tag = 'input window, operand 1, single buffered']
    #allocation6 [shape = 's32[1]{0}', space=sflag, size = 0x4, scoped, tag = 'scoped memory for tpu_custom_call.1']
    #allocation7 [shape = 'u8[16384]{0}', space=vmem, size = 0x4000, scoped, tag = 'output window, operand 0, single buffered']
    %8 = vsyncpa [#allocation3], 0
    %9 = vsyncpa [#allocation6], 0
    %10 = vsyncpa [#allocation4], 0
    // Predicated region
    $region2: #{tpu_custom_call.1} parent=1 // pred_check
      _
    $region3: #{tpu_custom_call.1} parent=1 // pred_check_branch
      %12 = sbr.rel (0) target = $region5
    $region4: #{tpu_custom_call.1} parent=1 // pred_region
      %s14 = ssub.s32 512, 512
      %15 = vsyncadd [#allocation3], %s14
      %s16 = sshll.u32 [#allocation2], 4
      %s17 = int_to_ptr.vmem [resolvable:$true] %s16
      %22 = dma.hbm_to_vmem [thread:$0]  %s0, 512, %s17, [#allocation3], 256, 256, 16
    $region5: #{tpu_custom_call.1} parent=1 // pred_fallthru
      _
    // Predicated region
    $region6: #{tpu_custom_call.1} parent=1 // pred_check
      _
    $region7: #{tpu_custom_call.1} parent=1 // pred_check_branch
      %24 = sbr.rel (0) target = $region9
    $region8: #{tpu_custom_call.1} parent=1 // pred_region
      %s26 = ssub.s32 8192, 8192
      %27 = vsyncadd [#allocation6], %s26
      %s28 = sshll.u32 [#allocation5], 4
      %s29 = int_to_ptr.vmem [resolvable:$true] %s28
      %34 = dma.hbm_to_vmem [thread:$0]  %s1, 8192, %s29, [#allocation6], 256, 256, 16
    $region9: #{tpu_custom_call.1} parent=1 // pred_fallthru
      _
    // Predicated region
    $region10: #{tpu_custom_call.1} parent=1 // pred_check
      _
    $region11: #{tpu_custom_call.1} parent=1 // pred_check_branch
      %36 = sbr.rel (0) target = $region13
    $region12: #{tpu_custom_call.1} parent=1 // pred_region
      _
    $region13: #{tpu_custom_call.1} parent=1 // pred_fallthru
      _
    // Predicated region
    $region14: #{tpu_custom_call.1} parent=1 // pred_check
      _
    $region15: #{tpu_custom_call.1} parent=1 // pred_check_branch
      %38 = sbr.rel (0) target = $region17
    $region16: #{tpu_custom_call.1} parent=1 // pred_region
      %39 = dma.done [#allocation3], 512
    $region17: #{tpu_custom_call.1} parent=1 // pred_fallthru
      _
    // Predicated region
    $region18: #{tpu_custom_call.1} parent=1 // pred_check
      _
    $region19: #{tpu_custom_call.1} parent=1 // pred_check_branch
      %41 = sbr.rel (0) target = $region21
    $region20: #{tpu_custom_call.1} parent=1 // pred_region
      %42 = dma.done [#allocation6], 8192
    $region21: #{tpu_custom_call.1} parent=1 // pred_fallthru
      _
    %v43 = vld [vmem:[#allocation2] sm:$0xff]
    %v44 = vld [vmem:[#allocation2 + $0x8] sm:$0xff]
    %v45 = vld [vmem:[#allocation2 + $0x10] sm:$0xff]
    %v46 = vld [vmem:[#allocation2 + $0x18] sm:$0xff]
    %v47 = vld [vmem:[#allocation5] sm:$0xff]
    %v48 = vld [vmem:[#allocation5 + $0x8] sm:$0xff]
    %v49 = vld [vmem:[#allocation5 + $0x10] sm:$0xff]
    %v50 = vld [vmem:[#allocation5 + $0x18] sm:$0xff]
    %v51 = vld [vmem:[#allocation5 + $0x20] sm:$0xff]
    %v52 = vld [vmem:[#allocation5 + $0x28] sm:$0xff]
    %v53 = vld [vmem:[#allocation5 + $0x30] sm:$0xff]
    %v54 = vld [vmem:[#allocation5 + $0x38] sm:$0xff]
    %v55 = vld [vmem:[#allocation5 + $0x40] sm:$0xff]
    %v56 = vld [vmem:[#allocation5 + $0x48] sm:$0xff]
    %v57 = vld [vmem:[#allocation5 + $0x50] sm:$0xff]
    %v58 = vld [vmem:[#allocation5 + $0x58] sm:$0xff]
    %v59 = vld [vmem:[#allocation5 + $0x60] sm:$0xff]
    %v60 = vld [vmem:[#allocation5 + $0x68] sm:$0xff]
    %v61 = vld [vmem:[#allocation5 + $0x70] sm:$0xff]
    %v62 = vld [vmem:[#allocation5 + $0x78] sm:$0xff]
    %v63 = vld [vmem:[#allocation5 + $0x80] sm:$0xff]
    %v64 = vld [vmem:[#allocation5 + $0x88] sm:$0xff]
    %v65 = vld [vmem:[#allocation5 + $0x90] sm:$0xff]
    %v66 = vld [vmem:[#allocation5 + $0x98] sm:$0xff]
    %v67 = vld [vmem:[#allocation5 + $0xa0] sm:$0xff]
    %v68 = vld [vmem:[#allocation5 + $0xa8] sm:$0xff]
    %v69 = vld [vmem:[#allocation5 + $0xb0] sm:$0xff]
    %v70 = vld [vmem:[#allocation5 + $0xb8] sm:$0xff]
    %v71 = vld [vmem:[#allocation5 + $0xc0] sm:$0xff]
    %v72 = vld [vmem:[#allocation5 + $0xc8] sm:$0xff]
    %v73 = vld [vmem:[#allocation5 + $0xd0] sm:$0xff]
    %v74 = vld [vmem:[#allocation5 + $0xd8] sm:$0xff]
    %v75 = vld [vmem:[#allocation5 + $0xe0] sm:$0xff]
    %v76 = vld [vmem:[#allocation5 + $0xe8] sm:$0xff]
    %v77 = vld [vmem:[#allocation5 + $0xf0] sm:$0xff]
    %v78 = vld [vmem:[#allocation5 + $0xf8] sm:$0xff]
    %v79 = vld [vmem:[#allocation5 + $0x100] sm:$0xff]
    %v80 = vld [vmem:[#allocation5 + $0x108] sm:$0xff]
    %v81 = vld [vmem:[#allocation5 + $0x110] sm:$0xff]
    %v82 = vld [vmem:[#allocation5 + $0x118] sm:$0xff]
    %v83 = vld [vmem:[#allocation5 + $0x120] sm:$0xff]
    %v84 = vld [vmem:[#allocation5 + $0x128] sm:$0xff]
    %v85 = vld [vmem:[#allocation5 + $0x130] sm:$0xff]
    %v86 = vld [vmem:[#allocation5 + $0x138] sm:$0xff]
    %v87 = vld [vmem:[#allocation5 + $0x140] sm:$0xff]
    %v88 = vld [vmem:[#allocation5 + $0x148] sm:$0xff]
    %v89 = vld [vmem:[#allocation5 + $0x150] sm:$0xff]
    %v90 = vld [vmem:[#allocation5 + $0x158] sm:$0xff]
    %v91 = vld [vmem:[#allocation5 + $0x160] sm:$0xff]
    %v92 = vld [vmem:[#allocation5 + $0x168] sm:$0xff]
    %v93 = vld [vmem:[#allocation5 + $0x170] sm:$0xff]
    %v94 = vld [vmem:[#allocation5 + $0x178] sm:$0xff]
    %v95 = vld [vmem:[#allocation5 + $0x180] sm:$0xff]
    %v96 = vld [vmem:[#allocation5 + $0x188] sm:$0xff]
    %v97 = vld [vmem:[#allocation5 + $0x190] sm:$0xff]
    %v98 = vld [vmem:[#allocation5 + $0x198] sm:$0xff]
    %v99 = vld [vmem:[#allocation5 + $0x1a0] sm:$0xff]
    %v100 = vld [vmem:[#allocation5 + $0x1a8] sm:$0xff]
    %v101 = vld [vmem:[#allocation5 + $0x1b0] sm:$0xff]
    %v102 = vld [vmem:[#allocation5 + $0x1b8] sm:$0xff]
    %v103 = vld [vmem:[#allocation5 + $0x1c0] sm:$0xff]
    %v104 = vld [vmem:[#allocation5 + $0x1c8] sm:$0xff]
    %v105 = vld [vmem:[#allocation5 + $0x1d0] sm:$0xff]
    %v106 = vld [vmem:[#allocation5 + $0x1d8] sm:$0xff]
    %v107 = vld [vmem:[#allocation5 + $0x1e0] sm:$0xff]
    %v108 = vld [vmem:[#allocation5 + $0x1e8] sm:$0xff]
    %v109 = vld [vmem:[#allocation5 + $0x1f0] sm:$0xff]
    %v110 = vld [vmem:[#allocation5 + $0x1f8] sm:$0xff]
    %v111 = vld [vmem:[%s2] sm:$0x3]
    %v113 = vlaneseq
    %v114 = vshrl.u32 %v113, 7
    %v115 = vsub.s32 0, %v114
    %v116 = vrot.slane %v111, %v115
    %v117 = vlaneseq
    %v118 = vshrl.u32 %v117, 7
    %v119 = vsub.s32 1, %v118
    %v120 = vrot.slane %v111, %v119
    %123 = vmatprep.subr.mxu0 %v78
    %124 = vmatpush1.msra.mxu0 %v77
    %125 = vmatprep.subr.mxu0 %v76
    %126 = vmatpush1.msra.mxu0 %v75
    %127 = vmatprep.subr.mxu0 %v74
    %128 = vmatpush1.msra.mxu0 %v73
    %129 = vmatprep.subr.mxu0 %v72
    %130 = vmatpush1.msra.mxu0 %v71
    %131 = vmatprep.subr.mxu0 %v70
    %132 = vmatpush1.msra.mxu0 %v69
    %133 = vmatprep.subr.mxu0 %v68
    %134 = vmatpush1.msra.mxu0 %v67
    %135 = vmatprep.subr.mxu0 %v66
    %136 = vmatpush1.msra.mxu0 %v65
    %137 = vmatprep.subr.mxu0 %v64
    %138 = vmatpush1.msra.mxu0 %v63
    %139 = vmatprep.subr.mxu0 %v62
    %140 = vmatpush1.msra.mxu0 %v61
    %141 = vmatprep.subr.mxu0 %v60
    %142 = vmatpush1.msra.mxu0 %v59
    %143 = vmatprep.subr.mxu0 %v58
    %144 = vmatpush1.msra.mxu0 %v57
    %145 = vmatprep.subr.mxu0 %v56
    %146 = vmatpush1.msra.mxu0 %v55
    %147 = vmatprep.subr.mxu0 %v54
    %148 = vmatpush1.msra.mxu0 %v53
    %149 = vmatprep.subr.mxu0 %v52
    %150 = vmatpush1.msra.mxu0 %v51
    %151 = vmatprep.subr.mxu0 %v50
    %152 = vmatpush1.msra.mxu0 %v49
    %153 = vmatprep.subr.mxu0 %v48
    %154 = vmatpush1.msra.mxu0 %v47
    %155 = vmatprep.subr.mxu0 %v110
    %156 = vmatpush2.msra.mxu0 %v109
    %157 = vmatprep.subr.mxu0 %v108
    %158 = vmatpush2.msra.mxu0 %v107
    %159 = vmatprep.subr.mxu0 %v106
    %160 = vmatpush2.msra.mxu0 %v105
    %161 = vmatprep.subr.mxu0 %v104
    %162 = vmatpush2.msra.mxu0 %v103
    %163 = vmatprep.subr.mxu0 %v102
    %164 = vmatpush2.msra.mxu0 %v101
    %165 = vmatprep.subr.mxu0 %v100
    %166 = vmatpush2.msra.mxu0 %v99
    %167 = vmatprep.subr.mxu0 %v98
    %168 = vmatpush2.msra.mxu0 %v97
    %169 = vmatprep.subr.mxu0 %v96
    %170 = vmatpush2.msra.mxu0 %v95
    %171 = vmatprep.subr.mxu0 %v94
    %172 = vmatpush2.msra.mxu0 %v93
    %173 = vmatprep.subr.mxu0 %v92
    %174 = vmatpush2.msra.mxu0 %v91
    %175 = vmatprep.subr.mxu0 %v90
    %176 = vmatpush2.msra.mxu0 %v89
    %177 = vmatprep.subr.mxu0 %v88
    %178 = vmatpush2.msra.mxu0 %v87
    %179 = vmatprep.subr.mxu0 %v86
    %180 = vmatpush2.msra.mxu0 %v85
    %181 = vmatprep.subr.mxu0 %v84
    %182 = vmatpush2.msra.mxu0 %v83
    %183 = vmatprep.subr.mxu0 %v82
    %184 = vmatpush2.msra.mxu0 %v81
    %185 = vmatprep.subr.mxu0 %v80
    %186 = vmatpush2.msra.mxu0 %v79
    %187 = vmatprep.mubr.f32.mxu0 %v44
    %188 = vmatmul.mubr.f32.gmra.mxu0 %v43
    %v189 = vpop.f32.mrf.mxu0
    %v190 = vadd.f32 %v116, %v189
    %v191 = vpop.f32.mrf.mxu0
    %v192 = vadd.f32 %v120, %v191
    %193 = vmatprep.mubr.f32.mxu0 %v46
    %194 = vmatmul.mubr.f32.gmra.mxu0 %v45
    %v195 = vpop.f32.mrf.mxu0
    %v196 = vadd.f32 %v116, %v195
    %v197 = vpop.f32.mrf.mxu0
    %v198 = vadd.f32 %v120, %v197
    %199 = vdwg.mxu0
    %200 = vst [vmem:[#allocation7] sm:$0xff] %v190
    %201 = vst [vmem:[#allocation7 + $0x8] sm:$0xff] %v192
    %202 = vst [vmem:[#allocation7 + $0x10] sm:$0xff] %v196
    %203 = vst [vmem:[#allocation7 + $0x18] sm:$0xff] %v198
    // Predicated region
    $region22: #{tpu_custom_call.1} parent=1 // pred_check
      _
    $region23: #{tpu_custom_call.1} parent=1 // pred_check_branch
      %205 = sbr.rel (0) target = $region25
    $region24: #{tpu_custom_call.1} parent=1 // pred_region
      %s207 = ssub.s32 512, 512
      %208 = vsyncadd [#allocation4], %s207
      %s209 = sshll.u32 [#allocation7], 4
      %s210 = int_to_ptr.vmem [resolvable:$true] %s209
      %215 = dma.vmem_to_hbm [thread:$0]  %s210, 512, %s3, [#allocation4], 256, 256, 16
    $region25: #{tpu_custom_call.1} parent=1 // pred_fallthru
      _
    // Predicated region
    $region26: #{tpu_custom_call.1} parent=1 // pred_check
      _
    $region27: #{tpu_custom_call.1} parent=1 // pred_check_branch
      %217 = sbr.rel (0) target = $region29
    $region28: #{tpu_custom_call.1} parent=1 // pred_region
      %218 = dma.done [#allocation4], 512
    $region29: #{tpu_custom_call.1} parent=1 // pred_fallthru
      _
    %219 = vsyncpa [#allocation3], 1
    %220 = vsyncpa [#allocation6], 1
    %221 = vsyncpa [#allocation4], 1

</llo_original>
